<compile_context>
chip_gen: v7x
topology: tpu7x:2x2x1
jax: 0.10.0
libtpu: 0.0.40
codegen_flags: <defaults>
</compile_context>

<pallas_src>
import math

import jax
import jax.numpy as jnp
from jax import lax
from jax.experimental import pallas as pl
from jax.experimental.pallas import tpu as pltpu


# ---------------------------------------------------------------------------
# Kernels
# ---------------------------------------------------------------------------
def _dot_xt_w(x, w):
    # x: (tm, K), w: (tn, K) torch layout -> contract dim 1 of both (x @ w.T).
    return lax.dot_general(
        x, w,
        dimension_numbers=(((1,), (1,)), ((), ())),
        preferred_element_type=jnp.float32)


def _linear_small_kernel(x_ref, w_ref, b_ref, o_ref):
    acc = _dot_xt_w(x_ref[...], w_ref[...])
    o_ref[...] = (acc + b_ref[...].astype(jnp.float32)).astype(o_ref.dtype)


def _linear_small_add_kernel(x_ref, w_ref, b_ref, other_ref, o_ref):
    acc = _dot_xt_w(x_ref[...], w_ref[...])
    acc = acc + b_ref[...].astype(jnp.float32) + other_ref[...].astype(jnp.float32)
    o_ref[...] = acc.astype(o_ref.dtype)


def _linear_fullk_kernel(x_ref, w_ref, b_ref, o_ref):
    # Full-K block: one MXU pass per (i, j) tile, no accumulator scratch.
    acc = _dot_xt_w(x_ref[...], w_ref[...])
    o_ref[...] = (acc + b_ref[...].astype(jnp.float32)).astype(o_ref.dtype)


def _linear_fullk_add_kernel(x_ref, w_ref, b_ref, other_ref, o_ref):
    acc = _dot_xt_w(x_ref[...], w_ref[...])
    # other_ref is either (1, tn) (row broadcast over sublanes) or (tm, tn).
    acc = acc + b_ref[...].astype(jnp.float32) + other_ref[...].astype(jnp.float32)
    o_ref[...] = acc.astype(o_ref.dtype)


def _linear_ktiled_kernel(x_ref, w_ref, b_ref, o_ref, acc_ref):
    k = pl.program_id(2)

    @pl.when(k == 0)
    def _():
        # Fold the bias into the accumulator init (saves an epilogue VPU pass).
        acc_ref[...] = jnp.broadcast_to(
            b_ref[...].astype(jnp.float32), acc_ref.shape)

    acc_ref[...] += _dot_xt_w(x_ref[...], w_ref[...])

    @pl.when(k == pl.num_programs(2) - 1)
    def _():
        o_ref[...] = acc_ref[...].astype(o_ref.dtype)


def _linear_ktiled_add_kernel(x_ref, w_ref, b_ref, other_ref, o_ref, acc_ref):
    k = pl.program_id(2)

    @pl.when(k == 0)
    def _():
        acc_ref[...] = jnp.broadcast_to(
            b_ref[...].astype(jnp.float32), acc_ref.shape)

    acc_ref[...] += _dot_xt_w(x_ref[...], w_ref[...])

    @pl.when(k == pl.num_programs(2) - 1)
    def _():
        o_ref[...] = (acc_ref[...]
                      + other_ref[...].astype(jnp.float32)).astype(o_ref.dtype)


# ---------------------------------------------------------------------------
# Wrapper helpers
# ---------------------------------------------------------------------------
def _round_up(x, m):
    return (x + m - 1) // m * m


def _min_sublane(dtype):
    # f32 -> 8, bf16 -> 16, int8/fp8 -> 32 (packed sublanes).
    return max(8, 32 // jnp.dtype(dtype).itemsize)


_SMALL_BYTES = 2 << 20              # single-block path below ~2 MiB working set
_TM, _TN, _TK = 512, 512, 1024      # max tiles; shrunk to fit the VMEM budget
_VMEM_BUDGET = 40 * 1024 * 1024     # double-buffered working-set budget
_VMEM_LIMIT = 48 * 1024 * 1024      # safe on v7x (64 MiB/TC), generous on v5e/v6e


def _fullk_workingset(tm, tn, K, in_bytes, out_bytes, other_mode):
    x_b = tm * K * in_bytes
    w_b = tn * K * in_bytes
    o_b = tm * tn * out_bytes
    b_b = tn * 4
    if other_mode == "full":
        oth_b = tm * tn * 4
    elif other_mode == "row":
        oth_b = tn * 4
    else:
        oth_b = 0
    return 2 * (x_b + w_b + o_b + b_b + oth_b)   # x2 for double buffering


def _select_fullk_tiles(B, out_f, K, in_bytes, out_bytes, other_mode, sub):
    tm = min(_TM, _round_up(B, sub))
    tn = min(_TN, _round_up(out_f, 128))

    def ws(a, b):
        return _fullk_workingset(a, b, K, in_bytes, out_bytes, other_mode)

    while ws(tm, tn) > _VMEM_BUDGET and (tm > sub or tn > 128):
        if tm >= tn and tm > sub:
            tm = max(sub, _round_up(tm // 2, sub))
        elif tn > 128:
            tn = max(128, _round_up(tn // 2, 128))
        else:
            tm = max(sub, _round_up(tm // 2, sub))
    if ws(tm, tn) > _VMEM_BUDGET:
        return None   # in_features too large for a full-K block -> K-tiled path

    # Megacore (v7x): make sure there are >=2 blocks along a parallel axis
    # whenever the problem is big enough to split.
    gm, gn = pl.cdiv(B, tm), pl.cdiv(out_f, tn)
    while gm * gn < 2 and tn > 128:
        tn = max(128, _round_up(tn // 2, 128))
        gn = pl.cdiv(out_f, tn)
    while gm * gn < 2 and tm > sub:
        tm = max(sub, _round_up(tm // 2, sub))
        gm = pl.cdiv(B, tm)
    return tm, tn


# ---------------------------------------------------------------------------
# Paths
# ---------------------------------------------------------------------------
def _linear_small(x, weight, b2d, other, B, in_f, out_f, out_dtype):
    full = lambda shape: pl.BlockSpec(shape, lambda: (0,) * len(shape))
    out_shape = jax.ShapeDtypeStruct((B, out_f), out_dtype)
    flops = 2 * B * in_f * out_f
    nbytes = ((B * in_f + out_f * in_f) * x.dtype.itemsize
              + out_f * b2d.dtype.itemsize
              + B * out_f * jnp.dtype(out_dtype).itemsize)

    if other is None:
        return pl.pallas_call(
            _linear_small_kernel,
            out_shape=out_shape,
            grid=(),
            in_specs=[full((B, in_f)), full((out_f, in_f)), full((1, out_f))],
            out_specs=full((B, out_f)),
            cost_estimate=pl.CostEstimate(flops=flops, transcendentals=0,
                                          bytes_accessed=nbytes),
        )(x, weight, b2d)

    ob, oo = other.shape
    return pl.pallas_call(
        _linear_small_add_kernel,
        out_shape=out_shape,
        grid=(),
        in_specs=[full((B, in_f)), full((out_f, in_f)), full((1, out_f)),
                  full((ob, oo))],
        out_specs=full((B, out_f)),
        cost_estimate=pl.CostEstimate(
            flops=flops + B * out_f, transcendentals=0,
            bytes_accessed=nbytes + ob * oo * other.dtype.itemsize),
    )(x, weight, b2d, other)


def _linear_fullk(x, weight, b2d, other, other_mode, B, in_f, out_f,
                  out_dtype, tm, tn):
    gm, gn = pl.cdiv(B, tm), pl.cdiv(out_f, tn)

    in_specs = [
        pl.BlockSpec((tm, in_f), lambda i, j: (i, 0)),   # x  (full-K block)
        pl.BlockSpec((tn, in_f), lambda i, j: (j, 0)),   # W  (torch layout)
        pl.BlockSpec((1, tn), lambda i, j: (0, j)),      # bias row
    ]
    args = [x, weight, b2d]

    flops = 2 * B * in_f * out_f
    nbytes = ((B * in_f + out_f * in_f) * x.dtype.itemsize
              + out_f * b2d.dtype.itemsize
              + B * out_f * jnp.dtype(out_dtype).itemsize)

    if other is None:
        kernel = _linear_fullk_kernel
    else:
        kernel = _linear_fullk_add_kernel
        if other_mode == "row":
            # (1, out_f) stays unbroadcast; sublane broadcast happens in-kernel.
            in_specs.append(pl.BlockSpec((1, tn), lambda i, j: (0, j)))
        else:
            in_specs.append(pl.BlockSpec((tm, tn), lambda i, j: (i, j)))
        args.append(other)
        flops += B * out_f
        nbytes += other.size * other.dtype.itemsize

    # TODO(synk): if xprof shows exposed K-stream DMA, add
    # pipeline_mode=pl.Buffered(3) on the x / W BlockSpecs.
    return pl.pallas_call(
        kernel,
        out_shape=jax.ShapeDtypeStruct((B, out_f), out_dtype),
        grid=(gm, gn),
        in_specs=in_specs,
        out_specs=pl.BlockSpec((tm, tn), lambda i, j: (i, j)),
        compiler_params=pltpu.CompilerParams(
            dimension_semantics=("parallel", "parallel"),
            vmem_limit_bytes=_VMEM_LIMIT),
        cost_estimate=pl.CostEstimate(flops=flops, transcendentals=0,
                                      bytes_accessed=nbytes),
    )(*args)


def _linear_ktiled(x, weight, b2d, other, other_mode, B, in_f, out_f,
                   out_dtype, sub):
    # Fallback for very large in_features only. M/N edges use masked edge
    # tiles (no host padding); only K is zero-padded for a correct contraction.
    tm = min(_TM, _round_up(B, sub))
    tn = min(_TN, _round_up(out_f, 128))
    tk = min(_TK, _round_up(in_f, 128))
    Kp = _round_up(in_f, tk)
    if Kp != in_f:
        x = jnp.pad(x, ((0, 0), (0, Kp - in_f)))
        weight = jnp.pad(weight, ((0, 0), (0, Kp - in_f)))

    gm, gn, gk = pl.cdiv(B, tm), pl.cdiv(out_f, tn), Kp // tk

    in_specs = [
        pl.BlockSpec((tm, tk), lambda i, j, k: (i, k)),   # x
        pl.BlockSpec((tn, tk), lambda i, j, k: (j, k)),   # W (torch layout)
        pl.BlockSpec((1, tn), lambda i, j, k: (0, j)),    # bias row
    ]
    args = [x, weight, b2d]

    flops = 2 * B * in_f * out_f
    nbytes = ((B * Kp + out_f * Kp) * x.dtype.itemsize
              + out_f * b2d.dtype.itemsize
              + B * out_f * jnp.dtype(out_dtype).itemsize)

    if other is None:
        kernel = _linear_ktiled_kernel
    else:
        kernel = _linear_ktiled_add_kernel
        if other_mode == "row":
            in_specs.append(pl.BlockSpec((1, tn), lambda i, j, k: (0, j)))
        else:
            in_specs.append(pl.BlockSpec((tm, tn), lambda i, j, k: (i, j)))
        args.append(other)
        flops += B * out_f
        nbytes += other.size * other.dtype.itemsize

    return pl.pallas_call(
        kernel,
        out_shape=jax.ShapeDtypeStruct((B, out_f), out_dtype),
        grid=(gm, gn, gk),
        in_specs=in_specs,
        out_specs=pl.BlockSpec((tm, tn), lambda i, j, k: (i, j)),
        scratch_shapes=[pltpu.VMEM((tm, tn), jnp.float32)],
        compiler_params=pltpu.CompilerParams(
            dimension_semantics=("parallel", "parallel", "arbitrary"),
            vmem_limit_bytes=_VMEM_LIMIT),
        cost_estimate=pl.CostEstimate(flops=flops, transcendentals=0,
                                      bytes_accessed=nbytes),
    )(*args)


# ---------------------------------------------------------------------------
# Public entry point
# ---------------------------------------------------------------------------
def linear_forward(x, weight, bias, other=None, use_bf16=False):
    """Pallas equivalent of Model.forward: x @ W^T + b (+ other).

    x:      (B, in_f)
    weight: (out_f, in_f)   -- torch Linear layout, never transposed/copied on host
    bias:   (out_f,)
    other:  optional, broadcastable to (B, out_f)
    """
    B, in_f = x.shape
    out_f, in_f_w = weight.shape
    assert in_f == in_f_w, "weight/in_features mismatch"
    out_dtype = x.dtype

    if use_bf16:
        # Optional MXU fast path (f32 accumulation kept inside the kernel).
        x = x.astype(jnp.bfloat16)
        weight = weight.astype(jnp.bfloat16)

    b2d = bias.reshape(1, out_f)                      # metadata-only reshape

    # Normalize `other` to 2-D and classify its broadcast pattern.
    other_mode = None
    if other is not None:
        if other.ndim == 0:
            other = other.reshape(1, 1)
        elif other.ndim == 1:
            other = other.reshape(1, other.shape[0])
        if other.shape == (B, out_f):
            other_mode = "full"
        elif other.shape == (1, out_f):
            other_mode = "row"
        else:
            other_mode = "other"

    total_bytes = (B * in_f + out_f * in_f + B * out_f) * x.dtype.itemsize
    if total_bytes <= _SMALL_BYTES:
        # Single-block path; in-kernel jnp broadcasting handles any `other` shape.
        return _linear_small(x, weight, b2d, other, B, in_f, out_f, out_dtype)

    if other_mode == "other":
        # Rare broadcast pattern (e.g. column / scalar) on the tiled path only.
        other = jnp.broadcast_to(other, (B, out_f))
        other_mode = "full"

    sub = _min_sublane(x.dtype)
    tiles = _select_fullk_tiles(B, out_f, in_f, x.dtype.itemsize,
                                jnp.dtype(out_dtype).itemsize, other_mode, sub)
    if tiles is not None:
        tm, tn = tiles
        return _linear_fullk(x, weight, b2d, other, other_mode,
                             B, in_f, out_f, out_dtype, tm, tn)
    return _linear_ktiled(x, weight, b2d, other, other_mode,
                          B, in_f, out_f, out_dtype, sub)


# ---------------------------------------------------------------------------
# Self-test
# ---------------------------------------------------------------------------
if __name__ == "__main__":
    keys = jax.random.split(jax.random.PRNGKey(0), 9)

    # --- Module-sized case: Linear(8 -> 8), x1 = (1, 8) -----------------------
    in_f, out_f, batch = 8, 8, 1
    bound = 1.0 / math.sqrt(in_f)
    weight = jax.random.uniform(keys[0], (out_f, in_f), jnp.float32, -bound, bound)
    bias = jax.random.uniform(keys[1], (out_f,), jnp.float32, -bound, bound)
    x1 = jax.random.normal(keys[2], (batch, in_f), jnp.float32)
    other = jax.random.normal(keys[3], (batch, out_f), jnp.float32)

    v1 = jax.block_until_ready(linear_forward(x1, weight, bias))
    v2 = jax.block_until_ready(linear_forward(x1, weight, bias, other))

    ref1 = x1 @ weight.T + bias
    ref2 = ref1 + other
    assert jnp.allclose(v1, ref1, atol=1e-5), "small-path mismatch (no other)"
    assert jnp.allclose(v2, ref2, atol=1e-5), "small-path mismatch (with other)"

    # --- Medium case: tiled full-K path, ragged N, non-128-multiple K ---------
    B2, K2, N2 = 512, 600, 520
    bound2 = 1.0 / math.sqrt(K2)
    weight2 = jax.random.uniform(keys[4], (N2, K2), jnp.float32, -bound2, bound2)
    bias2 = jax.random.uniform(keys[5], (N2,), jnp.float32, -bound2, bound2)
    x2 = jax.random.normal(keys[6], (B2, K2), jnp.float32)
    other_row = jax.random.normal(keys[7], (1, N2), jnp.float32)     # row broadcast
    other_full = jax.random.normal(keys[8], (B2, N2), jnp.float32)   # full

    t1 = jax.block_until_ready(linear_forward(x2, weight2, bias2))
    t2 = jax.block_until_ready(linear_forward(x2, weight2, bias2, other_row))
    t3 = jax.block_until_ready(linear_forward(x2, weight2, bias2, other_full))

    ref_t1 = jnp.dot(x2, weight2.T, precision=lax.Precision.HIGHEST) + bias2
    assert jnp.allclose(t1, ref_t1, atol=1e-2, rtol=1e-2), "tiled mismatch (no other)"
    assert jnp.allclose(t2, ref_t1 + other_row, atol=1e-2, rtol=1e-2), \
        "tiled mismatch (row other)"
    assert jnp.allclose(t3, ref_t1 + other_full, atol=1e-2, rtol=1e-2), \
        "tiled mismatch (full other)"

    print("KERNEL_OK")
</pallas_src>

<mosaic_0001>
module attributes {stable_mosaic.version = 11 : i64} {
  func.func @_linear_small_kernel(%arg0: memref<1x8xf32, #tpu.memory_space<vmem>>, %arg1: memref<8x8xf32, #tpu.memory_space<vmem>>, %arg2: memref<1x8xf32, #tpu.memory_space<vmem>>, %arg3: memref<1x8xf32, #tpu.memory_space<vmem>>) attributes {dimension_semantics = [], scalar_prefetch = 0 : i64, scratch_operands = 0 : i64, tpu.core_type = #tpu.core_type<tc>} {
    %c0 = arith.constant 0 : index
    %c0_0 = arith.constant 0 : index
    %0 = vector.load %arg0[%c0, %c0_0] : memref<1x8xf32, #tpu.memory_space<vmem>>, vector<1x8xf32>
    %c0_1 = arith.constant 0 : index
    %c0_2 = arith.constant 0 : index
    %1 = vector.load %arg1[%c0_1, %c0_2] : memref<8x8xf32, #tpu.memory_space<vmem>>, vector<8x8xf32>
    %cst = arith.constant dense<0.000000e+00> : vector<1x8xf32>
    %2 = tpu.matmul %0, %1, %cst {dimension_numbers = #tpu.dot_dimension_numbers<[1], [1], [0], [0], [0, 0, 1, 0], [], []>} : vector<1x8xf32>, vector<8x8xf32>, vector<1x8xf32> -> vector<1x8xf32>
    %c0_3 = arith.constant 0 : index
    %c0_4 = arith.constant 0 : index
    %3 = vector.load %arg2[%c0_3, %c0_4] : memref<1x8xf32, #tpu.memory_space<vmem>>, vector<1x8xf32>
    %4 = arith.addf %2, %3 : vector<1x8xf32>
    %c0_5 = arith.constant 0 : index
    %c0_6 = arith.constant 0 : index
    %5 = vector.load %arg3[%c0_5, %c0_6] : memref<1x8xf32, #tpu.memory_space<vmem>>, vector<1x8xf32>
    tpu.vector_store %arg3[%c0_5, %c0_6], %4 {strides = array<i32>} : memref<1x8xf32, #tpu.memory_space<vmem>>, vector<1x8xf32>,
    return
  }
}

</mosaic_0001>

<llo_original>
// kernel: tpu_custom_call.1
$region0: #{tpu_custom_call.1}
  #allocation0 [shape = 'u32[]', space=smem, size = 0x4, offset = 0x4, fixed_abs, tag = 'smem constant byte address 0x4 - core index']
  #allocation1 [shape = 'u32[144,128]{1,0:T(1,128)}', space=vmem, size = 0x12000, scoped, tag = 'internal scratch']
  %s0 = inlined_call_operand.hbm [shape: f32[1,8], index: 0, kind: input, shape index: {}]
  %s1 = inlined_call_operand.hbm [shape: f32[8,8], index: 1, kind: input, shape index: {}]
  %s2 = inlined_call_operand.vmem [shape: f32[1,8], index: 2, kind: input, shape index: {}]
  %s3 = inlined_call_operand.hbm [shape: f32[1,8], index: 3, kind: output, shape index: {}]
  %s4 = sld [smem:[#allocation0]]
  $region30: #{tpu_custom_call.1} parent=0
    _
  %s6 = ssub.s32 1, %s4
  %s7 = scalar_select 0, %s6, %s4
  $region1: #{tpu_custom_call.1} parent=0
    #allocation2 [shape = 'u8[512]{0}', space=vmem, size = 0x400, scoped, tag = 'input window, operand 0, single buffered']
    #allocation3 [shape = 's32[1]{0}', space=sflag, size = 0x4, scoped, tag = 'scoped memory for tpu_custom_call.1']
    #allocation4 [shape = 's32[1]{0}', space=sflag, size = 0x4, scoped, tag = 'scoped memory for tpu_custom_call.1']
    #allocation5 [shape = 'u8[4096]{0}', space=vmem, size = 0x1000, scoped, tag = 'input window, operand 1, single buffered']
    #allocation6 [shape = 's32[1]{0}', space=sflag, size = 0x4, scoped, tag = 'scoped memory for tpu_custom_call.1']
    #allocation7 [shape = 'u8[512]{0}', space=vmem, size = 0x400, scoped, tag = 'output window, operand 0, single buffered']
    %8 = vsyncpa [#allocation3], 0
    %9 = vsyncpa [#allocation6], 0
    %10 = vsyncpa [#allocation4], 0
    // Predicated region
    $region2: #{tpu_custom_call.1} parent=1 // pred_check
      _
    $region3: #{tpu_custom_call.1} parent=1 // pred_check_branch
      %12 = sbr.rel (0) target = $region5
    $region4: #{tpu_custom_call.1} parent=1 // pred_region
      %s14 = ssub.s32 16, 16
      %15 = vsyncadd [#allocation3], %s14
      %s17 = sshll.u32 [#allocation2], 4
      %s18 = int_to_ptr.vmem [resolvable:$true] %s17
      %20 = dma.hbm_to_vmem [thread:$0]  %s0, 16, %s18, [#allocation3]
    $region5: #{tpu_custom_call.1} parent=1 // pred_fallthru
      _
    // Predicated region
    $region6: #{tpu_custom_call.1} parent=1 // pred_check
      _
    $region7: #{tpu_custom_call.1} parent=1 // pred_check_branch
      %22 = sbr.rel (0) target = $region9
    $region8: #{tpu_custom_call.1} parent=1 // pred_region
      %s24 = ssub.s32 128, 128
      %25 = vsyncadd [#allocation6], %s24
      %s27 = sshll.u32 [#allocation5], 4
      %s28 = int_to_ptr.vmem [resolvable:$true] %s27
      %30 = dma.hbm_to_vmem [thread:$0]  %s1, 128, %s28, [#allocation6]
    $region9: #{tpu_custom_call.1} parent=1 // pred_fallthru
      _
    // Predicated region
    $region10: #{tpu_custom_call.1} parent=1 // pred_check
      _
    $region11: #{tpu_custom_call.1} parent=1 // pred_check_branch
      %32 = sbr.rel (0) target = $region13
    $region12: #{tpu_custom_call.1} parent=1 // pred_region
      _
    $region13: #{tpu_custom_call.1} parent=1 // pred_fallthru
      _
    // Predicated region
    $region14: #{tpu_custom_call.1} parent=1 // pred_check
      _
    $region15: #{tpu_custom_call.1} parent=1 // pred_check_branch
      %34 = sbr.rel (0) target = $region17
    $region16: #{tpu_custom_call.1} parent=1 // pred_region
      %35 = dma.done [#allocation3], 16
    $region17: #{tpu_custom_call.1} parent=1 // pred_fallthru
      _
    // Predicated region
    $region18: #{tpu_custom_call.1} parent=1 // pred_check
      _
    $region19: #{tpu_custom_call.1} parent=1 // pred_check_branch
      %37 = sbr.rel (0) target = $region21
    $region20: #{tpu_custom_call.1} parent=1 // pred_region
      %38 = dma.done [#allocation6], 128
    $region21: #{tpu_custom_call.1} parent=1 // pred_fallthru
      _
    %v39 = vld [vmem:[#allocation2] sm:$0x1]
    %v40 = vld [vmem:[#allocation5] sm:$0xff]
    %v41 = vld [vmem:[%s2] sm:$0x1]
    %vm42 = vcmask 64512
    %v44 = vsel %vm42, %v39, 0
    %v47 = vsel %vm42, %v40, 0
    %49 = vmatprep.subr.mxu0 0.0
    %50 = vmatpush1.xpose.msra.mxu0 %v47
    %51 = vmatprep.subr.mxu0 0.0
    %52 = vmatpush1.xpose.msra.mxu0 0.0
    %53 = vmatprep.subr.mxu0 0.0
    %54 = vmatpush1.xpose.msra.mxu0 0.0
    %55 = vmatprep.subr.mxu0 0.0
    %56 = vmatpush1.xpose.msra.mxu0 0.0
    %57 = vmatprep.subr.mxu0 0.0
    %58 = vmatpush1.xpose.msra.mxu0 0.0
    %59 = vmatprep.subr.mxu0 0.0
    %60 = vmatpush1.xpose.msra.mxu0 0.0
    %61 = vmatprep.subr.mxu0 0.0
    %62 = vmatpush1.xpose.msra.mxu0 0.0
    %63 = vmatprep.subr.mxu0 0.0
    %64 = vmatpush1.xpose.msra.mxu0 0.0
    %65 = vmatprep.subr.mxu0 0.0
    %66 = vmatpush1.xpose.msra.mxu0 0.0
    %67 = vmatprep.subr.mxu0 0.0
    %68 = vmatpush1.xpose.msra.mxu0 0.0
    %69 = vmatprep.subr.mxu0 0.0
    %70 = vmatpush1.xpose.msra.mxu0 0.0
    %71 = vmatprep.subr.mxu0 0.0
    %72 = vmatpush1.xpose.msra.mxu0 0.0
    %73 = vmatprep.subr.mxu0 0.0
    %74 = vmatpush1.xpose.msra.mxu0 0.0
    %75 = vmatprep.subr.mxu0 0.0
    %76 = vmatpush1.xpose.msra.mxu0 0.0
    %77 = vmatprep.subr.mxu0 0.0
    %78 = vmatpush1.xpose.msra.mxu0 0.0
    %79 = vmatprep.subr.mxu0 0.0
    %80 = vmatpush1.xpose.msra.mxu0 0.0
    %81 = vmatprep.subr.mxu0 0.0
    %82 = vmatpush1.xpose.msra.mxu0 0.0
    %83 = vmatprep.subr.mxu0 0.0
    %84 = vmatpush1.xpose.msra.mxu0 0.0
    %85 = vmatprep.subr.mxu0 0.0
    %86 = vmatpush1.xpose.msra.mxu0 0.0
    %87 = vmatprep.subr.mxu0 0.0
    %88 = vmatpush1.xpose.msra.mxu0 0.0
    %89 = vmatprep.subr.mxu0 0.0
    %90 = vmatpush1.xpose.msra.mxu0 0.0
    %91 = vmatprep.subr.mxu0 0.0
    %92 = vmatpush1.xpose.msra.mxu0 0.0
    %93 = vmatprep.subr.mxu0 0.0
    %94 = vmatpush1.xpose.msra.mxu0 0.0
    %95 = vmatprep.subr.mxu0 0.0
    %96 = vmatpush1.xpose.msra.mxu0 0.0
    %97 = vmatprep.subr.mxu0 0.0
    %98 = vmatpush1.xpose.msra.mxu0 0.0
    %99 = vmatprep.subr.mxu0 0.0
    %100 = vmatpush1.xpose.msra.mxu0 0.0
    %101 = vmatprep.subr.mxu0 0.0
    %102 = vmatpush1.xpose.msra.mxu0 0.0
    %103 = vmatprep.subr.mxu0 0.0
    %104 = vmatpush1.xpose.msra.mxu0 0.0
    %105 = vmatprep.subr.mxu0 0.0
    %106 = vmatpush1.xpose.msra.mxu0 0.0
    %107 = vmatprep.subr.mxu0 0.0
    %108 = vmatpush1.xpose.msra.mxu0 0.0
    %109 = vmatprep.subr.mxu0 0.0
    %110 = vmatpush1.xpose.msra.mxu0 0.0
    %111 = vmatprep.subr.mxu0 0.0
    %112 = vmatpush1.xpose.msra.mxu0 0.0
    %113 = vmatprep.mubr.f32.mxu0 0.0
    %114 = vmatmul.mubr.f32.gmra.mrb[0].mxu0 %v44
    %v115 = vpop.f32.mrb[0].mxu0
    %v116 = vadd.f32 %v41, %v115
    %v117 = vpop.f32.mrb[0].mxu0
    %118 = vdwg.mxu0
    %vm119 = vcmask 57344
    %120 = vst.msk [vmem:[#allocation7] sm:$0x1] %vm119, %v116
    // Predicated region
    $region22: #{tpu_custom_call.1} parent=1 // pred_check
      _
    $region23: #{tpu_custom_call.1} parent=1 // pred_check_branch
      %122 = sbr.rel (0) target = $region25
    $region24: #{tpu_custom_call.1} parent=1 // pred_region
      %s124 = ssub.s32 16, 16
      %125 = vsyncadd [#allocation4], %s124
      %s127 = sshll.u32 [#allocation7], 4
      %s128 = int_to_ptr.vmem [resolvable:$true] %s127
      %130 = dma.vmem_to_hbm [thread:$0]  %s128, 16, %s3, [#allocation4]
    $region25: #{tpu_custom_call.1} parent=1 // pred_fallthru
      _
    // Predicated region
    $region26: #{tpu_custom_call.1} parent=1 // pred_check
      _
    $region27: #{tpu_custom_call.1} parent=1 // pred_check_branch
      %132 = sbr.rel (0) target = $region29
    $region28: #{tpu_custom_call.1} parent=1 // pred_region
      %133 = dma.done [#allocation4], 16
    $region29: #{tpu_custom_call.1} parent=1 // pred_fallthru
      _
    %134 = vsyncpa [#allocation3], 1
    %135 = vsyncpa [#allocation6], 1
    %136 = vsyncpa [#allocation4], 1

</llo_original>
